<compile_context>
chip_gen: v7x
topology: tpu7x:2x2x1
jax: 0.10.0
libtpu: 0.0.40
codegen_flags: <defaults>
</compile_context>

<pallas_src>
import functools
import math

import jax
import jax.numpy as jnp
from jax.experimental import pallas as pl
from jax.experimental.pallas import tpu as pltpu


def _round_up(v, m):
    return ((v + m - 1) // m) * m


def _const_block_spec(shape, index_map):
    """Grid-invariant operand: single-buffer it if this JAX supports pipeline_mode."""
    if hasattr(pl, "Buffered"):
        try:
            return pl.BlockSpec(shape, index_map, pipeline_mode=pl.Buffered(1))
        except Exception:  # older JAX without pipeline_mode / Buffered(1)
            pass
    return pl.BlockSpec(shape, index_map)


def tdnn_forward(x, weight, bias, *, stride=1, padding=0, tile_l=512,
                 compute_dtype=jnp.bfloat16):
    """Conv1d forward (PyTorch TDNN semantics) via a Pallas TPU kernel."""
    N, C_in, L = x.shape
    C_out, C_in_w, K = weight.shape
    assert C_in_w == C_in
    L_out = (L + 2 * padding - K) // stride + 1
    assert L_out >= 1

    # ---- output tiling along L_out ------------------------------------------
    if L_out <= tile_l:
        if N == 1 and L_out > 128:
            # v7x: guarantee >= 2 grid steps so both TensorCores are used.
            TL = _round_up(-(-L_out // 2), 128)
            num_lt = -(-L_out // TL)
        else:
            TL, num_lt = L_out, 1                 # single tile: full-extent block
    else:
        # lane-dense multiple of 128; on v6e pass tile_l=1024..2048 for long L.
        TL = max(128, (tile_l // 128) * 128)
        num_lt = -(-L_out // TL)
    TLs = TL * stride                             # input cols advanced per tile
    span = (TL - 1) * stride + K                  # input window width per tile
    assert num_lt == 1 or (num_lt - 1) * TLs < L, "degenerate padding/tiling combo"

    # ---- static window decomposition ----------------------------------------
    take = min(TLs, L) if num_lt == 1 else TLs
    mid_w = min(take, span - padding)             # cols taken from the main block
    right_need = span - padding - mid_w
    r_w = max(K - stride - padding, 0)            # real-data halo cols right of main
    right_have = min(right_need, r_w)
    right_zeros = right_need - right_have
    main_w = L if num_lt == 1 else TLs            # main-x block width

    # ---- which tiles need the zero-pad / ragged mask (static) ---------------
    need_left_mask = padding > 0                           # only tile 0
    lim = L + padding - span                               # right mask iff lt*TLs > lim
    lt_right0 = 0 if lim < 0 else lim // TLs + 1
    need_right_mask = lt_right0 <= num_lt - 1
    need_mask = need_left_mask or need_right_mask

    # ---- per-tile halo: boundary cols beyond the main block, lane-padded ----
    use_halo = (padding + r_w) > 0
    if use_halo:
        hw = padding + r_w
        hw_p = _round_up(hw, 128)                 # lane-dense halo DMA
        offs = jnp.concatenate([jnp.arange(-padding, 0, dtype=jnp.int32),
                                TLs + jnp.arange(r_w, dtype=jnp.int32)])
        offs = jnp.concatenate(
            [offs, jnp.full((hw_p - hw,), offs[-1], dtype=jnp.int32)])
        gidx = jnp.arange(num_lt, dtype=jnp.int32)[:, None] * TLs + offs[None, :]
        gidx = jnp.clip(gidx, 0, L - 1)
        halo = jnp.take(x, gidx.reshape(-1), axis=2)            # (N, C_in, num_lt*hw_p)
        halo = halo.reshape(N, C_in, num_lt, hw_p).transpose(0, 2, 1, 3)
    else:
        hw = hw_p = 0
        halo = None

    # ---- weight layouts ------------------------------------------------------
    C_out_p = _round_up(C_out, 8)                 # aligned, unmasked output stores
    cd_size = jnp.dtype(compute_dtype).itemsize
    sub_pack = max(1, 4 // cd_size) * 8           # 16 rows for bf16, 8 for f32
    use_stacked = C_in < 128                      # small C_in: fuse K taps into one dot
    w_km = jnp.transpose(weight, (2, 0, 1))       # (K, C_out, C_in): w_km[k,o,c]=w[o,c,k]
    w_km = jnp.pad(w_km, ((0, 0), (0, C_out_p - C_out), (0, 0)))
    if use_stacked:
        C_in_pad = _round_up(C_in, sub_pack)      # sublane-aligned tap blocks
        KC_p = K * C_in_pad
        w_arr = jnp.pad(w_km, ((0, 0), (0, 0), (0, C_in_pad - C_in)))
        w_arr = jnp.transpose(w_arr, (1, 0, 2)).reshape(C_out_p, KC_p)
        w_arr = w_arr.astype(compute_dtype)       # (C_out_p, K*C_in_pad)
        win_dtype = jnp.float32                   # v5e: keep assembly/mask off bf16 VPU
    else:
        C_in_pad = C_in
        KC_p = 0
        w_arr = w_km.astype(compute_dtype)        # (K, C_out_p, C_in)
        win_dtype = compute_dtype
    bias_p = jnp.pad(bias, (0, C_out_p - C_out)).reshape(C_out_p, 1)
    bias_p = bias_p.astype(jnp.float32)

    n_in = 4 if use_halo else 3

    def kernel(*refs):
        if use_halo:
            xm_ref, xh_ref, w_ref, b_ref = refs[:4]
        else:
            xm_ref, w_ref, b_ref = refs[:3]
            xh_ref = None
        o_ref = refs[n_in]
        win_ref = refs[n_in + 1]
        stk_ref = refs[n_in + 2] if use_stacked else None

        lt = pl.program_id(1)

        # -- assemble the (C_in, span) input window in VMEM (static offsets) --
        off = 0
        if padding > 0:
            win_ref[:, 0:padding] = xh_ref[0, 0, :, :padding].astype(win_dtype)
            off += padding
        if mid_w > 0:
            win_ref[:, off:off + mid_w] = xm_ref[0, :, :mid_w].astype(win_dtype)
            off += mid_w
        if right_have > 0:
            win_ref[:, off:off + right_have] = (
                xh_ref[0, 0, :, padding:padding + right_have].astype(win_dtype))
            off += right_have
        if right_zeros > 0:
            win_ref[:, off:off + right_zeros] = jnp.zeros((C_in, right_zeros),
                                                          win_dtype)

        # -- conv zero-padding + ragged-edge mask, boundary tiles only --------
        if need_mask:
            def apply_mask():
                col = jax.lax.broadcasted_iota(jnp.int32, (1, span), 1)
                gcol = col + (lt * TLs - padding)
                keep = (gcol >= 0) & (gcol < L)
                win_ref[...] = jnp.where(keep, win_ref[...], 0.0)

            if num_lt == 1:
                apply_mask()
            else:
                pred = None
                if need_left_mask:
                    pred = lt == 0
                if need_right_mask:
                    rp = lt >= lt_right0
                    pred = rp if pred is None else jnp.logical_or(pred, rp)
                pl.when(pred)(apply_mask)

        def tap(k):
            if stride == 1:
                t = win_ref[:, k:k + TL]
            else:
                t = win_ref[:, pl.ds(k, TL, stride=stride)]    # strided vld
            return t.astype(compute_dtype)

        if use_stacked:
            # single fused MXU contraction over K*C_in_pad (aligned tap blocks)
            pad_rows = C_in_pad - C_in
            for k in range(K):                    # K is small & static -> unrolled
                t = tap(k)
                if pad_rows:
                    t = jnp.concatenate(
                        [t, jnp.zeros((pad_rows, TL), compute_dtype)], axis=0)
                stk_ref[k * C_in_pad:(k + 1) * C_in_pad, :] = t
            acc = jnp.dot(w_ref[...], stk_ref[...],
                          preferred_element_type=jnp.float32)
        else:
            # large C_in already fills the MXU depth: K accumulated matmuls,
            # no stacked-operand store/reload pass.
            acc = jnp.dot(w_ref[0], tap(0), preferred_element_type=jnp.float32)
            for k in range(1, K):
                acc = acc + jnp.dot(w_ref[k], tap(k),
                                    preferred_element_type=jnp.float32)

        # full, unmasked (C_out_p, TL) store; cropped to C_out in the wrapper
        o_ref[0] = (acc + b_ref[...]).astype(o_ref.dtype)

    # ---- in/out specs ---------------------------------------------------------
    in_specs = [pl.BlockSpec((1, C_in, main_w), lambda n, lt: (n, 0, lt))]
    inputs = [x]
    if use_halo:
        in_specs.append(pl.BlockSpec((1, 1, C_in, hw_p), lambda n, lt: (n, lt, 0, 0)))
        inputs.append(halo)
    if use_stacked:
        in_specs.append(_const_block_spec((C_out_p, KC_p), lambda n, lt: (0, 0)))
    else:
        in_specs.append(_const_block_spec((K, C_out_p, C_in),
                                          lambda n, lt: (0, 0, 0)))
    inputs.append(w_arr)
    in_specs.append(_const_block_spec((C_out_p, 1), lambda n, lt: (0, 0)))
    inputs.append(bias_p)

    scratch_shapes = [pltpu.VMEM((C_in, span), win_dtype)]
    if use_stacked:
        scratch_shapes.append(pltpu.VMEM((KC_p, TL), compute_dtype))

    # ---- VMEM budget: size the scoped limit from the actual buffers ----------
    x_blk = C_in * main_w * 4
    halo_blk = C_in * hw_p * 4 if use_halo else 0
    o_blk = C_out_p * TL * 4
    w_bytes = (C_out_p * KC_p if use_stacked else K * C_out_p * C_in) * cd_size
    win_bytes = C_in * span * jnp.dtype(win_dtype).itemsize
    stk_bytes = KC_p * TL * cd_size if use_stacked else 0
    needed = (2 * (x_blk + halo_blk + o_blk) + 2 * (w_bytes + C_out_p * 4)
              + win_bytes + stk_bytes)
    vmem_limit = int(min(max(2 * needed + (4 << 20), 32 << 20), 64 << 20))

    out = pl.pallas_call(
        kernel,
        out_shape=jax.ShapeDtypeStruct((N, C_out_p, L_out), x.dtype),
        grid_spec=pltpu.PrefetchScalarGridSpec(
            num_scalar_prefetch=0,
            grid=(N, num_lt),
            in_specs=in_specs,
            out_specs=pl.BlockSpec((1, C_out_p, TL), lambda n, lt: (n, 0, lt)),
            scratch_shapes=scratch_shapes,
        ),
        compiler_params=pltpu.CompilerParams(
            dimension_semantics=("parallel", "parallel"),
            vmem_limit_bytes=vmem_limit,
        ),
    )(*inputs)

    if C_out_p != C_out:
        out = out[:, :C_out, :]
    return out


def _reference_conv1d(x, weight, bias, *, stride, padding):
    """Pure-JAX reference matching torch.nn.Conv1d (full f32 precision)."""
    out = jax.lax.conv_general_dilated(
        x, weight,
        window_strides=(stride,),
        padding=[(padding, padding)],
        dimension_numbers=("NCH", "OIH", "NCH"),
        precision=jax.lax.Precision.HIGHEST)
    return out + bias.reshape(1, -1, 1)


def _check(key, *, N, C_in, C_out, K, L, stride, padding, tile_l):
    kx, kw, kb = jax.random.split(key, 3)
    fan_in = C_in * K
    bound = 1.0 / math.sqrt(fan_in)
    weight = jax.random.uniform(kw, (C_out, C_in, K), jnp.float32, -bound, bound)
    bias = jax.random.uniform(kb, (C_out,), jnp.float32, -bound, bound)
    x = jax.random.normal(kx, (N, C_in, L), jnp.float32)

    fwd = jax.jit(functools.partial(tdnn_forward, stride=stride, padding=padding,
                                    tile_l=tile_l))
    out = jax.block_until_ready(fwd(x, weight, bias))

    # The kernel feeds the MXU in bf16 with f32 accumulation (intentional), so
    # compare against a full-precision conv on bf16-rounded operands.
    x_q = x.astype(jnp.bfloat16).astype(jnp.float32)
    w_q = weight.astype(jnp.bfloat16).astype(jnp.float32)
    ref = _reference_conv1d(x_q, w_q, bias, stride=stride, padding=padding)

    L_out = (L + 2 * padding - K) // stride + 1
    assert out.shape == ref.shape == (N, C_out, L_out), (out.shape, ref.shape)
    err = float(jnp.max(jnp.abs(out - ref)))
    assert jnp.allclose(out, ref, atol=1e-3, rtol=1e-3), \
        f"mismatch vs ref, max |err|={err}"


if __name__ == "__main__":
    key = jax.random.PRNGKey(0)
    keys = jax.random.split(key, 6)

    # 1) TDNN-like toy shape (single L tile): small C_in -> stacked path.
    _check(keys[0], N=2, C_in=4, C_out=8, K=3, L=16, stride=1, padding=1, tile_l=512)

    # 2) multi-tile: ragged last tile, halo, non-multiple-of-8 channels (crop).
    _check(keys[1], N=2, C_in=12, C_out=20, K=5, L=333, stride=1, padding=2, tile_l=128)

    # 3) large C_in -> direct K-matmul path (no stacked operand), multi-tile.
    _check(keys[2], N=2, C_in=128, C_out=16, K=3, L=300, stride=1, padding=1, tile_l=128)

    # 4) padding >= K - stride (r_w == 0 path), boundary-only masking.
    _check(keys[3], N=2, C_in=8, C_out=16, K=3, L=200, stride=1, padding=2, tile_l=128)

    # 5) module-default style: K=1, padding=0 -> no halo, no mask.
    _check(keys[4], N=2, C_in=64, C_out=32, K=1, L=256, stride=1, padding=0, tile_l=128)

    # 6) short sequence with large padding: right_zeros path, single tile.
    _check(keys[5], N=2, C_in=4, C_out=8, K=3, L=8, stride=1, padding=2, tile_l=512)

    print("KERNEL_OK")
</pallas_src>

<mosaic_0001>
module attributes {stable_mosaic.version = 11 : i64} {
  func.func @kernel(%arg0: i32, %arg1: i32, %arg2: memref<1x4x16xf32, #tpu.memory_space<vmem>>, %arg3: memref<1x1x4x128xf32, #tpu.memory_space<vmem>>, %arg4: memref<8x48xbf16, #tpu.memory_space<vmem>>, %arg5: memref<8x1xf32, #tpu.memory_space<vmem>>, %arg6: memref<1x8x16xf32, #tpu.memory_space<vmem>>, %arg7: memref<4x18xf32, #tpu.memory_space<vmem>>, %arg8: memref<48x16xbf16, #tpu.memory_space<vmem>>) attributes {dimension_semantics = [#tpu.dimension_semantics<parallel>, #tpu.dimension_semantics<parallel>], iteration_bounds = array<i64: 2, 1>, scalar_prefetch = 0 : i64, scratch_operands = 2 : i64, tpu.core_type = #tpu.core_type<tc>, window_params = [{transform_indices = @transform_0, window_bounds = array<i64: 1, 4, 16>}, {transform_indices = @transform_1, window_bounds = array<i64: 1, 1, 4, 128>}, {pipeline_mode = #tpu.pipeline_mode<synchronous>, transform_indices = @transform_2, window_bounds = array<i64: 8, 48>}, {pipeline_mode = #tpu.pipeline_mode<synchronous>, transform_indices = @transform_3, window_bounds = array<i64: 8, 1>}, {transform_indices = @transform_4, window_bounds = array<i64: 1, 8, 16>}]} {
    %c0 = arith.constant 0 : index
    %c0_0 = arith.constant 0 : index
    %c0_1 = arith.constant 0 : index
    %c0_2 = arith.constant 0 : index
    %0 = vector.load %arg3[%c0, %c0_0, %c0_1, %c0_2] : memref<1x1x4x128xf32, #tpu.memory_space<vmem>>, vector<1x1x4x1xf32>
    %1 = vector.shape_cast %0 : vector<1x1x4x1xf32> to vector<4x1xf32>
    %c0_3 = arith.constant 0 : index
    %c0_4 = arith.constant 0 : index
    %2 = vector.load %arg7[%c0_3, %c0_4] : memref<4x18xf32, #tpu.memory_space<vmem>>, vector<4x1xf32>
    tpu.vector_store %arg7[%c0_3, %c0_4], %1 {strides = array<i32>} : memref<4x18xf32, #tpu.memory_space<vmem>>, vector<4x1xf32>,
    %c0_5 = arith.constant 0 : index
    %c0_6 = arith.constant 0 : index
    %c0_7 = arith.constant 0 : index
    %3 = vector.load %arg2[%c0_5, %c0_6, %c0_7] : memref<1x4x16xf32, #tpu.memory_space<vmem>>, vector<1x4x16xf32>
    %4 = vector.shape_cast %3 : vector<1x4x16xf32> to vector<4x16xf32>
    %c0_8 = arith.constant 0 : index
    %c1 = arith.constant 1 : index
    %5 = vector.load %arg7[%c0_8, %c1] : memref<4x18xf32, #tpu.memory_space<vmem>>, vector<4x16xf32>
    tpu.vector_store %arg7[%c0_8, %c1], %4 {strides = array<i32>} : memref<4x18xf32, #tpu.memory_space<vmem>>, vector<4x16xf32>,
    %c0_9 = arith.constant 0 : index
    %c0_10 = arith.constant 0 : index
    %c0_11 = arith.constant 0 : index
    %c1_12 = arith.constant 1 : index
    %6 = vector.load %arg3[%c0_9, %c0_10, %c0_11, %c1_12] : memref<1x1x4x128xf32, #tpu.memory_space<vmem>>, vector<1x1x4x1xf32>
    %7 = vector.shape_cast %6 : vector<1x1x4x1xf32> to vector<4x1xf32>
    %c0_13 = arith.constant 0 : index
    %c17 = arith.constant 17 : index
    %8 = vector.load %arg7[%c0_13, %c17] : memref<4x18xf32, #tpu.memory_space<vmem>>, vector<4x1xf32>
    tpu.vector_store %arg7[%c0_13, %c17], %7 {strides = array<i32>} : memref<4x18xf32, #tpu.memory_space<vmem>>, vector<4x1xf32>,
    %9 = tpu.iota {dimensions = array<i32: 1>} : vector<1x18xi32>
    %c16_i32 = arith.constant 16 : i32
    %10 = arith.muli %arg1, %c16_i32 : i32
    %c1_i32 = arith.constant 1 : i32
    %11 = arith.subi %10, %c1_i32 : i32
    %12 = vector.broadcast %11 : i32 to vector<1x18xi32>
    %13 = arith.addi %9, %12 : vector<1x18xi32>
    %c0_i32 = arith.constant 0 : i32
    %14 = vector.broadcast %c0_i32 : i32 to vector<1x18xi32>
    %15 = arith.cmpi sge, %13, %14 : vector<1x18xi32>
    %c16_i32_14 = arith.constant 16 : i32
    %16 = vector.broadcast %c16_i32_14 : i32 to vector<1x18xi32>
    %17 = arith.cmpi slt, %13, %16 : vector<1x18xi32>
    %18 = arith.andi %15, %17 : vector<1x18xi1>
    %c0_15 = arith.constant 0 : index
    %c0_16 = arith.constant 0 : index
    %19 = vector.load %arg7[%c0_15, %c0_16] : memref<4x18xf32, #tpu.memory_space<vmem>>, vector<4x18xf32>
    %cst = arith.constant 0.000000e+00 : f32
    %20 = vector.shape_cast %18 : vector<1x18xi1> to vector<1x18xi1>
    %21 = vector.broadcast %20 : vector<1x18xi1> to vector<4x18xi1>
    %22 = vector.broadcast %cst : f32 to vector<4x18xf32>
    %23 = arith.select %21, %19, %22 : vector<4x18xi1>, vector<4x18xf32>
    %c0_17 = arith.constant 0 : index
    %c0_18 = arith.constant 0 : index
    %24 = vector.load %arg7[%c0_17, %c0_18] : memref<4x18xf32, #tpu.memory_space<vmem>>, vector<4x18xf32>
    tpu.vector_store %arg7[%c0_17, %c0_18], %23 {strides = array<i32>} : memref<4x18xf32, #tpu.memory_space<vmem>>, vector<4x18xf32>,
    %c0_19 = arith.constant 0 : index
    %c0_20 = arith.constant 0 : index
    %25 = vector.load %arg7[%c0_19, %c0_20] : memref<4x18xf32, #tpu.memory_space<vmem>>, vector<4x16xf32>
    %26 = arith.truncf %25 : vector<4x16xf32> to vector<4x16xbf16>
    %cst_21 = arith.constant 0.000000e+00 : bf16
    %27 = vector.broadcast %cst_21 : bf16 to vector<12x16xbf16>
    %28 = tpu.concatenate %26, %27 in 0 : vector<4x16xbf16>, vector<12x16xbf16> -> vector<16x16xbf16>
    %c0_22 = arith.constant 0 : index
    %c0_23 = arith.constant 0 : index
    %29 = vector.load %arg8[%c0_22, %c0_23] : memref<48x16xbf16, #tpu.memory_space<vmem>>, vector<16x16xbf16>
    tpu.vector_store %arg8[%c0_22, %c0_23], %28 {strides = array<i32>} : memref<48x16xbf16, #tpu.memory_space<vmem>>, vector<16x16xbf16>,
    %c0_24 = arith.constant 0 : index
    %c1_25 = arith.constant 1 : index
    %30 = vector.load %arg7[%c0_24, %c1_25] : memref<4x18xf32, #tpu.memory_space<vmem>>, vector<4x16xf32>
    %31 = arith.truncf %30 : vector<4x16xf32> to vector<4x16xbf16>
    %cst_26 = arith.constant 0.000000e+00 : bf16
    %32 = vector.broadcast %cst_26 : bf16 to vector<12x16xbf16>
    %33 = tpu.concatenate %31, %32 in 0 : vector<4x16xbf16>, vector<12x16xbf16> -> vector<16x16xbf16>
    %c16 = arith.constant 16 : index
    %c0_27 = arith.constant 0 : index
    %34 = vector.load %arg8[%c16, %c0_27] : memref<48x16xbf16, #tpu.memory_space<vmem>>, vector<16x16xbf16>
    tpu.vector_store %arg8[%c16, %c0_27], %33 {strides = array<i32>} : memref<48x16xbf16, #tpu.memory_space<vmem>>, vector<16x16xbf16>,
    %c0_28 = arith.constant 0 : index
    %c2 = arith.constant 2 : index
    %35 = vector.load %arg7[%c0_28, %c2] : memref<4x18xf32, #tpu.memory_space<vmem>>, vector<4x16xf32>
    %36 = arith.truncf %35 : vector<4x16xf32> to vector<4x16xbf16>
    %cst_29 = arith.constant 0.000000e+00 : bf16
    %37 = vector.broadcast %cst_29 : bf16 to vector<12x16xbf16>
    %38 = tpu.concatenate %36, %37 in 0 : vector<4x16xbf16>, vector<12x16xbf16> -> vector<16x16xbf16>
    %c32 = arith.constant 32 : index
    %c0_30 = arith.constant 0 : index
    %39 = vector.load %arg8[%c32, %c0_30] : memref<48x16xbf16, #tpu.memory_space<vmem>>, vector<16x16xbf16>
    tpu.vector_store %arg8[%c32, %c0_30], %38 {strides = array<i32>} : memref<48x16xbf16, #tpu.memory_space<vmem>>, vector<16x16xbf16>,
    %c0_31 = arith.constant 0 : index
    %c0_32 = arith.constant 0 : index
    %40 = vector.load %arg4[%c0_31, %c0_32] : memref<8x48xbf16, #tpu.memory_space<vmem>>, vector<8x48xbf16>
    %c0_33 = arith.constant 0 : index
    %c0_34 = arith.constant 0 : index
    %41 = vector.load %arg8[%c0_33, %c0_34] : memref<48x16xbf16, #tpu.memory_space<vmem>>, vector<48x16xbf16>
    %cst_35 = arith.constant dense<0.000000e+00> : vector<8x16xf32>
    %42 = tpu.matmul %40, %41, %cst_35 {dimension_numbers = #tpu.dot_dimension_numbers<[1], [0], [0], [1], [0, 0, 1, 1], [], []>} : vector<8x48xbf16>, vector<48x16xbf16>, vector<8x16xf32> -> vector<8x16xf32>
    %c0_36 = arith.constant 0 : index
    %c0_37 = arith.constant 0 : index
    %43 = vector.load %arg5[%c0_36, %c0_37] : memref<8x1xf32, #tpu.memory_space<vmem>>, vector<8x1xf32>
    %44 = vector.broadcast %43 : vector<8x1xf32> to vector<8x16xf32>
    %45 = arith.addf %42, %44 : vector<8x16xf32>
    %c0_38 = arith.constant 0 : index
    %c0_39 = arith.constant 0 : index
    %c0_40 = arith.constant 0 : index
    %46 = vector.load %arg6[%c0_38, %c0_39, %c0_40] : memref<1x8x16xf32, #tpu.memory_space<vmem>>, vector<1x8x16xf32>
    %47 = vector.shape_cast %46 : vector<1x8x16xf32> to vector<8x16xf32>
    %48 = vector.shape_cast %45 : vector<8x16xf32> to vector<1x8x16xf32>
    tpu.vector_store %arg6[%c0_38, %c0_39, %c0_40], %48 {strides = array<i32>} : memref<1x8x16xf32, #tpu.memory_space<vmem>>, vector<1x8x16xf32>,
    return
  }
  func.func @transform_0(%arg0: i32, %arg1: i32) -> (i32, i32, i32) {
    %c0_i32 = arith.constant 0 : i32
    %c0_i32_0 = arith.constant 0 : i32
    return %arg0, %c0_i32, %arg1 : i32, i32, i32
  }
  func.func @transform_1(%arg0: i32, %arg1: i32) -> (i32, i32, i32, i32) {
    %c0_i32 = arith.constant 0 : i32
    %c0_i32_0 = arith.constant 0 : i32
    %c0_i32_1 = arith.constant 0 : i32
    return %arg0, %arg1, %c0_i32, %c0_i32_0 : i32, i32, i32, i32
  }
  func.func @transform_2(%arg0: i32, %arg1: i32) -> (i32, i32) {
    %c0_i32 = arith.constant 0 : i32
    %c0_i32_0 = arith.constant 0 : i32
    %c0_i32_1 = arith.constant 0 : i32
    return %c0_i32, %c0_i32_0 : i32, i32
  }
  func.func @transform_3(%arg0: i32, %arg1: i32) -> (i32, i32) {
    %c0_i32 = arith.constant 0 : i32
    %c0_i32_0 = arith.constant 0 : i32
    %c0_i32_1 = arith.constant 0 : i32
    return %c0_i32, %c0_i32_0 : i32, i32
  }
  func.func @transform_4(%arg0: i32, %arg1: i32) -> (i32, i32, i32) {
    %c0_i32 = arith.constant 0 : i32
    %c0_i32_0 = arith.constant 0 : i32
    return %arg0, %c0_i32, %arg1 : i32, i32, i32
  }
}

</mosaic_0001>

<llo_original>
// kernel: tdnn_forward.1
$region0: #{tdnn_forward.1}
  #allocation0 [shape = 'u32[]', space=smem, size = 0x4, offset = 0x4, fixed_abs, tag = 'smem constant byte address 0x4 - core index']
  #allocation1 [shape = 'u32[144,128]{1,0:T(1,128)}', space=vmem, size = 0x12000, scoped, tag = 'internal scratch']
  #allocation2 [shape = 'f32[4,18]{1,0:T(4,128)}', space=vmem, size = 0x800, scoped, tag = 'scratch operand']
  #allocation3 [shape = 'bf16[48,16]{1,0:T(16,128)(2,1)}', space=vmem, size = 0x3000, scoped, tag = 'scratch operand']
  %s0 = inlined_call_operand.vmem [shape: f32[2,4,16], index: 0, kind: input, shape index: {}]
  %s1 = inlined_call_operand.vmem [shape: f32[2,1,4,128], index: 1, kind: input, shape index: {}]
  %s2 = inlined_call_operand.vmem [shape: bf16[8,48], index: 2, kind: input, shape index: {}]
  %s3 = inlined_call_operand.vmem [shape: f32[8,1], index: 3, kind: input, shape index: {}]
  %s4 = inlined_call_operand.hbm [shape: f32[2,8,16], index: 4, kind: output, shape index: {}]
  %s5 = sld [smem:[#allocation0]]
  $region49: #{tdnn_forward.1} parent=0
    _
  %s7 = ssub.s32 1, %s5
  %s8 = scalar_select 0, %s7, %s5
  $region1: #{tdnn_forward.1} parent=0
    #allocation4 [shape = 'u8[8192]{0}', space=vmem, size = 0x2000, scoped, tag = 'output window, operand 0']
    #allocation5 [shape = 's32[2]{0}', space=sflag, size = 0x8, scoped, tag = 'scoped memory for tdnn_forward.1']
    %9 = vsyncpa [#allocation5], 0
    %s10 = scalar_lea.sflag [#allocation5], 1
    %11 = vsyncpa %s10, 0
    loop: start=0, step=1, limit=4
    $region2: #{tdnn_forward.1} parent=1 // loop_pre_header
      _
    $region3: #{tdnn_forward.1} parent=1 // loop_header
      %s13 = sphi 0, %s17
      %p14 = scmp.ge.s32.totalorder %s13, 4
      %s20 = sphi 0, %s32
      %s21 = sphi 0, %s28
      %s22 = sphi 0, %s20
      %s23 = sphi 0, %s21
      %s24 = sphi 0, %s22
      %s25 = sphi 0, %s23
      %s37 = sphi 0, %s39
      %s40 = sphi 0, %s37
      %s41 = sphi 0, %s40
      %s57 = sphi 0, %s41
      %s65 = sphi 0, %s67
      %s68 = sphi 0, %s65
      %s69 = sphi 0, %s68
      %s85 = sphi 0, %s69
      %s89 = sphi 0, %s89
      %s91 = sphi 0, %s89
      %s92 = sphi 0, %s91
      %s106 = sphi 0, %s92
      %s110 = sphi 0, %s110
      %s112 = sphi 0, %s110
      %s113 = sphi 0, %s112
      %s127 = sphi 0, %s113
      %s135 = sphi 0, %s137
      %s138 = sphi 0, %s135
      %s139 = sphi 0, %s138
      %s155 = sphi 0, %s139
    $region4: #{tdnn_forward.1} parent=1 // loop_header_branch
      %16 = sbr.rel (%p14) target = $region8
    $region5: #{tdnn_forward.1} parent=1 // loop_body
      %s18 = ssub.s32 %s13, 1
      %s19 = ssub.s32 %s13, 2
      %s26 = sadd.s32 1, %s21
      %p27 = scmp.ge.s32.totalorder %s26, 1
      %s28 = scalar_select %p27, 0, %s26
      %s29 = sadd.s32 1, %s20
      %s30 = scalar_select %p27, %s29, %s20
      %p31 = scmp.ge.s32.totalorder %s30, 2
      %s32 = scalar_select %p31, 0, %s30
      %s33 = ssub.s32 %s20, %s32
      %s34 = ssub.s32 %s21, %s28
      %s35 = sor.u32 %s33, %s34
      %p36 = scmp.eq.s32.totalorder %s35, 0
      %s38 = sadd.s32 %s37, 1
      %s39 = scalar_select %p36, %s37, %s38
      %p42 = pneg %p36
      %p43 = scmp.eq.s32.totalorder %s13, 1
      %p44 = por %p42, %p43
      %p45 = scmp.ne.s32.totalorder %s37, %s40
      %p46 = scmp.eq.s32.totalorder %s13, 0
      %p47 = por %p45, %p46
      %p48 = scmp.ne.s32.totalorder %s37, %s40
      %p49 = scmp.eq.s32.totalorder %s18, 1
      %p50 = por %p48, %p49
      %p51 = scmp.ne.s32.totalorder %s40, %s41
      %p52 = scmp.eq.s32.totalorder %s18, 0
      %p53 = por %p51, %p52
      %p54 = scmp.ne.s32.totalorder %s40, %s41
      %p55 = scmp.eq.s32.totalorder %s19, 1
      %p56 = por %p54, %p55
      %p58 = scmp.ne.s32.totalorder %s41, %s57
      %p59 = scmp.eq.s32.totalorder %s19, 0
      %p60 = por %p58, %p59
      %s61 = ssub.s32 %s20, %s32
      %s62 = ssub.s32 %s21, %s28
      %s63 = sor.u32 %s61, %s62
      %p64 = scmp.eq.s32.totalorder %s63, 0
      %s66 = sadd.s32 %s65, 1
      %s67 = scalar_select %p64, %s65, %s66
      %p70 = pneg %p64
      %p71 = scmp.eq.s32.totalorder %s13, 1
      %p72 = por %p70, %p71
      %p73 = scmp.ne.s32.totalorder %s65, %s68
      %p74 = scmp.eq.s32.totalorder %s13, 0
      %p75 = por %p73, %p74
      %p76 = scmp.ne.s32.totalorder %s65, %s68
      %p77 = scmp.eq.s32.totalorder %s18, 1
      %p78 = por %p76, %p77
      %p79 = scmp.ne.s32.totalorder %s68, %s69
      %p80 = scmp.eq.s32.totalorder %s18, 0
      %p81 = por %p79, %p80
      %p82 = scmp.ne.s32.totalorder %s68, %s69
      %p83 = scmp.eq.s32.totalorder %s19, 1
      %p84 = por %p82, %p83
      %p86 = scmp.ne.s32.totalorder %s69, %s85
      %p87 = scmp.eq.s32.totalorder %s19, 0
      %p88 = por %p86, %p87
      %s90 = sadd.s32 %s89, 1
      %p93 = scmp.eq.s32.totalorder %s13, 1
      %p94 = scmp.ne.s32.totalorder %s89, %s91
      %p95 = scmp.eq.s32.totalorder %s13, 0
      %p96 = por %p94, %p95
      %p97 = scmp.ne.s32.totalorder %s89, %s91
      %p98 = scmp.eq.s32.totalorder %s18, 1
      %p99 = por %p97, %p98
      %p100 = scmp.ne.s32.totalorder %s91, %s92
      %p101 = scmp.eq.s32.totalorder %s18, 0
      %p102 = por %p100, %p101
      %p103 = scmp.ne.s32.totalorder %s91, %s92
      %p104 = scmp.eq.s32.totalorder %s19, 1
      %p105 = por %p103, %p104
      %p107 = scmp.ne.s32.totalorder %s92, %s106
      %p108 = scmp.eq.s32.totalorder %s19, 0
      %p109 = por %p107, %p108
      %s111 = sadd.s32 %s110, 1
      %p114 = scmp.eq.s32.totalorder %s13, 1
      %p115 = scmp.ne.s32.totalorder %s110, %s112
      %p116 = scmp.eq.s32.totalorder %s13, 0
      %p117 = por %p115, %p116
      %p118 = scmp.ne.s32.totalorder %s110, %s112
      %p119 = scmp.eq.s32.totalorder %s18, 1
      %p120 = por %p118, %p119
      %p121 = scmp.ne.s32.totalorder %s112, %s113
      %p122 = scmp.eq.s32.totalorder %s18, 0
      %p123 = por %p121, %p122
      %p124 = scmp.ne.s32.totalorder %s112, %s113
      %p125 = scmp.eq.s32.totalorder %s19, 1
      %p126 = por %p124, %p125
      %p128 = scmp.ne.s32.totalorder %s113, %s127
      %p129 = scmp.eq.s32.totalorder %s19, 0
      %p130 = por %p128, %p129
      %s131 = ssub.s32 %s20, %s32
      %s132 = ssub.s32 %s21, %s28
      %s133 = sor.u32 %s131, %s132
      %p134 = scmp.eq.s32.totalorder %s133, 0
      %s136 = sadd.s32 %s135, 1
      %s137 = scalar_select %p134, %s135, %s136
      %p140 = pneg %p134
      %p141 = scmp.eq.s32.totalorder %s13, 1
      %p142 = por %p140, %p141
      %p143 = scmp.ne.s32.totalorder %s135, %s138
      %p144 = scmp.eq.s32.totalorder %s13, 0
      %p145 = por %p143, %p144
      %p146 = scmp.ne.s32.totalorder %s135, %s138
      %p147 = scmp.eq.s32.totalorder %s18, 1
      %p148 = por %p146, %p147
      %p149 = scmp.ne.s32.totalorder %s138, %s139
      %p150 = scmp.eq.s32.totalorder %s18, 0
      %p151 = por %p149, %p150
      %p152 = scmp.ne.s32.totalorder %s138, %s139
      %p153 = scmp.eq.s32.totalorder %s19, 1
      %p154 = por %p152, %p153
      %p156 = scmp.ne.s32.totalorder %s139, %s155
      %p157 = scmp.eq.s32.totalorder %s19, 0
      %p158 = por %p156, %p157
      %p159 = scmp.le.s32.totalorder 1, %s13
      %p160 = scmp.lt.s32.totalorder %s13, 3
      %p161 = pnand %p159, %p160
      %p162 = pneg %p161
      // Predicated region
      $region9: #{tdnn_forward.1} parent=5 // pred_check
        _
      $region10: #{tdnn_forward.1} parent=5 // pred_check_branch
        %164 = sbr.rel (%p161) target = $region12
      $region11: #{tdnn_forward.1} parent=5 // pred_region
        %s165 = ssub.s32 %s13, 1
        // Predicated region
        $region13: #{tdnn_forward.1} parent=11 // pred_check
          %p166 = pneg %p102
        $region14: #{tdnn_forward.1} parent=11 // pred_check_branch
          %168 = sbr.rel (%p166) target = $region16
        $region15: #{tdnn_forward.1} parent=11 // pred_region
          _
        $region16: #{tdnn_forward.1} parent=11 // pred_fallthru
          _
        // Predicated region
        $region17: #{tdnn_forward.1} parent=11 // pred_check
          %p169 = pneg %p123
        $region18: #{tdnn_forward.1} parent=11 // pred_check_branch
          %171 = sbr.rel (%p169) target = $region20
        $region19: #{tdnn_forward.1} parent=11 // pred_region
          _
        $region20: #{tdnn_forward.1} parent=11 // pred_fallthru
          _
      $region12: #{tdnn_forward.1} parent=5 // pred_fallthru
        _
      %p172 = scmp.lt.s32.totalorder %s13, 2
      // Predicated region
      $region21: #{tdnn_forward.1} parent=5 // pred_check
        %p173 = pneg %p172
      $region22: #{tdnn_forward.1} parent=5 // pred_check_branch
        %175 = sbr.rel (%p173) target = $region24
      $region23: #{tdnn_forward.1} parent=5 // pred_region
        // Predicated region
        $region25: #{tdnn_forward.1} parent=23 // pred_check
          %p176 = pneg %p47
        $region26: #{tdnn_forward.1} parent=23 // pred_check_branch
          %178 = sbr.rel (%p176) target = $region28
        $region27: #{tdnn_forward.1} parent=23 // pred_region
          %p179 = scmp.lt.s32.totalorder %s20, 1
          %s180 = scalar_select %p179, %s20, 1
          %p181 = scmp.lt.s32.totalorder %s21, 0
          %s182 = scalar_select %p181, %s21, 0
          %s183 = sadd.s32 %s182, %s180
          %s184 = smul.addr %s183, 4
          %s185 = scalar_lea.vmem %s0, %s184
        $region28: #{tdnn_forward.1} parent=23 // pred_fallthru
          _
        // Predicated region
        $region29: #{tdnn_forward.1} parent=23 // pred_check
          %p186 = pneg %p75
        $region30: #{tdnn_forward.1} parent=23 // pred_check_branch
          %188 = sbr.rel (%p186) target = $region32
        $region31: #{tdnn_forward.1} parent=23 // pred_region
          %p189 = scmp.lt.s32.totalorder %s20, 1
          %s190 = scalar_select %p189, %s20, 1
          %p191 = scmp.lt.s32.totalorder %s21, 0
          %s192 = scalar_select %p191, %s21, 0
          %s193 = sadd.s32 %s192, %s190
          %s194 = smul.addr %s193, 4
          %s195 = scalar_lea.vmem %s1, %s194
        $region32: #{tdnn_forward.1} parent=23 // pred_fallthru
          _
      $region24: #{tdnn_forward.1} parent=5 // pred_fallthru
        _
      %p196 = scmp.le.s32.totalorder 1, %s13
      %p197 = scmp.lt.s32.totalorder %s13, 3
      %p198 = pnand %p196, %p197
      %p199 = pneg %p198
      // Predicated region
      $region33: #{tdnn_forward.1} parent=5 // pred_check
        _
      $region34: #{tdnn_forward.1} parent=5 // pred_check_branch
        %201 = sbr.rel (%p198) target = $region36
      $region35: #{tdnn_forward.1} parent=5 // pred_region
        %s202 = ssub.s32 %s13, 1
        %p203 = scmp.lt.s32.totalorder %s22, 1
        %s204 = scalar_select %p203, %s22, 1
        %p205 = scmp.lt.s32.totalorder %s23, 0
        %s206 = scalar_select %p205, %s23, 0
        %s207 = sadd.s32 %s206, %s204
        %s208 = smul.addr %s207, 4
        %s209 = scalar_lea.vmem %s0, %s208
        %p210 = pneg %p53
        %p211 = pneg %p50
        %p212 = scmp.lt.s32.totalorder %s22, 1
        %s213 = scalar_select %p212, %s22, 1
        %p214 = scmp.lt.s32.totalorder %s23, 0
        %s215 = scalar_select %p214, %s23, 0
        %s216 = sadd.s32 %s215, %s213
        %s217 = smul.addr %s216, 4
        %s218 = scalar_lea.vmem %s1, %s217
        %p219 = pneg %p81
        %p220 = pneg %p78
        %p221 = pneg %p102
        %p222 = pneg %p99
        %p223 = pneg %p123
        %p224 = pneg %p120
        %p225 = pneg %p151
        %p226 = pneg %p148
        %s227 = sand.u32 %s138, 1
        %s228 = scalar_lea.sflag [#allocation5], %s227
        %s229 = sand.u32 %s138, 1
        %s230 = smul.addr %s229, 8
        %s231 = scalar_lea.vmem [#allocation4], %s230
        %p232 = scmp.lt.s32.totalorder %s22, 1
        %s233 = scalar_select %p232, %s22, 1
        %p234 = scmp.lt.s32.totalorder %s23, 0
        %s235 = scalar_select %p234, %s23, 0
        %s236 = sadd.s32 %s235, %s233
        %s237 = smul.addr %s236, 4
        %s238 = scalar_lea.vmem %s0, %s237
        %p239 = scmp.lt.s32.totalorder %s22, 1
        %s240 = scalar_select %p239, %s22, 1
        %p241 = scmp.lt.s32.totalorder %s23, 0
        %s242 = scalar_select %p241, %s23, 0
        %s243 = sadd.s32 %s242, %s240
        %s244 = smul.addr %s243, 4
        %s245 = scalar_lea.vmem %s1, %s244
        %v247 = vld [vmem:[%s245] sm:$0xf]
        %vm248 = vcmask 3072
        %249 = vst.msk [vmem:[#allocation2] sm:$0xf] %vm248, %v247
        %v250 = vld [vmem:[%s238] sm:$0xf]
        %252 = vrot.lane.b32.xlu0 %v250, 1
        %v253 = vpop.permute.xlu0 %252
        %vm255 = vcmask 134152
        %256 = vst.msk [vmem:[#allocation2] sm:$0xf] %vm255, %v253
        %v257 = vld [vmem:[%s245] sm:$0xf]
        %259 = vrot.lane.b32.xlu0 %v257, 16
        %v260 = vpop.permute.xlu0 %259
        %vm262 = vcmask 142472
        %263 = vst.msk [vmem:[#allocation2] sm:$0xf] %vm262, %v260
        %v264 = vlaneseq
        %v265 = vand.u32 %v264, 127
        %s266 = smul.u32 %s23, 16
        %s267 = ssub.s32 %s266, 1
        %v268 = vstv %s267
        %v269 = vadd.s32 %v265, %v268
        %vm270 = vcmp.ge.s32.totalorder %v269, 0
        %vm271 = vcmp.lt.s32.totalorder %v269, 16
        %vm272 = vmand %vm270, %vm271
        %v273 = vld [vmem:[#allocation2] sm:$0xf]
        %v274 = vsel %vm272, 1, 0
        %vm275 = vcmp.eq.s32.totalorder %v274, 1
        %v276 = vsel %vm275, %v273, 0.0
        %vm277 = vcmask 142336
        %278 = vst.msk [vmem:[#allocation2] sm:$0xf] %vm277, %v276
        %v279 = vld [vmem:[#allocation2] sm:$0xf]
        %v280 = vpack.c.bf16 %v279, %v279
        %vm281 = vcmask 1041408
        %v284 = vsel %vm281, %v280, 0
        %vm286 = vcmask 130048
        %287 = vst.msk [vmem:[#allocation3] sm:$0xff] %vm286, %v284
        %v288 = vld [vmem:[#allocation2] sm:$0xf]
        %v289 = vpack.c.bf16 %v288, %v288
        %v291 = vsel %vm281, %v289, 0
        %293 = vrot.lane.b32.xlu0 %v291, 127
        %v294 = vpop.permute.xlu0 %293
        %296 = vst.msk [vmem:[#allocation3 + $0x8] sm:$0xff] %vm286, %v294
        %v297 = vld [vmem:[#allocation2] sm:$0xf]
        %v298 = vpack.c.bf16 %v297, %v297
        %v300 = vsel %vm281, %v298, 0
        %302 = vrot.lane.b32.xlu0 %v300, 126
        %v303 = vpop.permute.xlu0 %302
        %305 = vst.msk [vmem:[#allocation3 + $0x10] sm:$0xff] %vm286, %v303
        %v306 = vld [vmem:[%s2] sm:$0xf]
        %v307 = vld [vmem:[#allocation3] sm:$0xff]
        %v308 = vld [vmem:[#allocation3 + $0x8] sm:$0xff]
        %v309 = vld [vmem:[#allocation3 + $0x10] sm:$0xff]
        %v310 = vld [vmem:[%s3] sm:$0xff]
        %312 = vset.pattern.permute.xlu0 0
        %313 = vperm.xlu0 %312, %v310
        %v314 = vpop.permute.xlu0 %313
        %vm316 = vcmask 392192
        %v318 = vsel %vm316, %v306, 0
        %320 = vmatprep.subr.bf16.mxu0 0
        %321 = vmatpush1.bf16.msra.mxu0 %v307
        %322 = vmatprep.subr.bf16.mxu0 0
        %323 = vmatpush1.bf16.msra.mxu0 %v308
        %324 = vmatprep.subr.bf16.mxu0 0
        %325 = vmatpush1.bf16.msra.mxu0 %v309
        %326 = vmatprep.subr.bf16.mxu0 0
        %327 = vmatpush1.bf16.msra.mxu0 0
        %328 = vmatprep.subr.bf16.mxu0 0
        %329 = vmatpush1.bf16.msra.mxu0 0
        %330 = vmatprep.subr.bf16.mxu0 0
        %331 = vmatpush1.bf16.msra.mxu0 0
        %332 = vmatprep.subr.bf16.mxu0 0
        %333 = vmatpush1.bf16.msra.mxu0 0
        %334 = vmatprep.subr.bf16.mxu0 0
        %335 = vmatpush1.bf16.msra.mxu0 0
        %336 = vmatprep.subr.bf16.mxu0 0
        %337 = vmatpush1.bf16.msra.mxu0 0
        %338 = vmatprep.subr.bf16.mxu0 0
        %339 = vmatpush1.bf16.msra.mxu0 0
        %340 = vmatprep.subr.bf16.mxu0 0
        %341 = vmatpush1.bf16.msra.mxu0 0
        %342 = vmatprep.subr.bf16.mxu0 0
        %343 = vmatpush1.bf16.msra.mxu0 0
        %344 = vmatprep.subr.bf16.mxu0 0
        %345 = vmatpush1.bf16.msra.mxu0 0
        %346 = vmatprep.subr.bf16.mxu0 0
        %347 = vmatpush1.bf16.msra.mxu0 0
        %348 = vmatprep.subr.bf16.mxu0 0
        %349 = vmatpush1.bf16.msra.mxu0 0
        %350 = vmatprep.subr.bf16.mxu0 0
        %351 = vmatpush1.bf16.msra.mxu0 0
        %352 = vmatprep.mubr.bf16.mxu0 0
        %353 = vmatmul.mubr.bf16.gmra.mrb[0].mxu0 %v318
        %v354 = vpop.f32.mrb[0].mxu0
        %v355 = vadd.f32 %v314, %v354
        %v356 = vpop.f32.mrb[0].mxu0
        %v357 = vpop.f32.mrb[0].mxu0
        %v358 = vpop.f32.mrb[0].mxu0
        %359 = vdwg.mxu0
        %360 = vst.msk [vmem:[%s231] sm:$0xff] %vm286, %v355
        %s361 = sand.u32 %s138, 1
        %s362 = scalar_lea.sflag [#allocation5], %s361
        %s363 = sand.u32 %s138, 1
        %s364 = smul.addr %s363, 8
        %s365 = scalar_lea.vmem [#allocation4], %s364
        // Predicated region
        $region37: #{tdnn_forward.1} parent=35 // pred_check
          %p366 = pneg %p148
        $region38: #{tdnn_forward.1} parent=35 // pred_check_branch
          %368 = sbr.rel (%p366) target = $region40
        $region39: #{tdnn_forward.1} parent=35 // pred_region
          %s370 = ssub.s32 128, 128
          %371 = vsyncadd %s362, %s370
          %s372 = sadd.s32 %s23, %s22
          %s373 = smul.addr %s372, 128
          %s374 = scalar_lea.hbm %s4, %s373
          %s376 = sshll.u32 %s365, 4
          %s377 = int_to_ptr.vmem [resolvable:$true] %s376
          %379 = dma.vmem_to_hbm [thread:$0]  %s377, 128, %s374, %s362
        $region40: #{tdnn_forward.1} parent=35 // pred_fallthru
          _
      $region36: #{tdnn_forward.1} parent=5 // pred_fallthru
        _
      %p380 = scmp.le.s32.totalorder 2, %s13
      // Predicated region
      $region41: #{tdnn_forward.1} parent=5 // pred_check
        %p381 = pneg %p380
      $region42: #{tdnn_forward.1} parent=5 // pred_check_branch
        %383 = sbr.rel (%p381) target = $region44
      $region43: #{tdnn_forward.1} parent=5 // pred_region
        %s384 = ssub.s32 %s13, 2
        // Predicated region
        $region45: #{tdnn_forward.1} parent=43 // pred_check
          %p385 = pneg %p154
        $region46: #{tdnn_forward.1} parent=43 // pred_check_branch
          %387 = sbr.rel (%p385) target = $region48
        $region47: #{tdnn_forward.1} parent=43 // pred_region
          %s388 = sand.u32 %s139, 1
          %s389 = scalar_lea.sflag [#allocation5], %s388
          %s390 = sand.u32 %s139, 1
          %s391 = smul.addr %s390, 8
          %s392 = scalar_lea.vmem [#allocation4], %s391
          %393 = dma.done %s389, 128
        $region48: #{tdnn_forward.1} parent=43 // pred_fallthru
          _
      $region44: #{tdnn_forward.1} parent=5 // pred_fallthru
        _
    $region6: #{tdnn_forward.1} parent=1 // loop_footer
      %s17 = sadd.s32 1, %s13
    $region7: #{tdnn_forward.1} parent=1 // loop_footer_branch
      %12 = sbr.rel target = $region3
    $region8: #{tdnn_forward.1} parent=1 // loop_exit
      _
    %394 = vsyncpa [#allocation5], 1
    %s395 = scalar_lea.sflag [#allocation5], 1
    %396 = vsyncpa %s395, 1

</llo_original>
